<compile_context>
chip_gen: v7x
topology: tpu7x:2x2x1
jax: 0.10.0
libtpu: 0.0.40
codegen_flags: <defaults>
</compile_context>

<pallas_src>
import functools

import jax
import jax.numpy as jnp
from jax import lax
from jax.experimental import pallas as pl
from jax.experimental.pallas import tpu as pltpu


def _gt_loss_kernel(gt_ref, pr_ref, out_ref, cache_ref, tsum_ref, osum_ref,
                    *, n_cams, total_chunks):
    """grid = (n_tiles,); gt_ref / pr_ref blocks are (12, n_chunks, 8, chunk_w)."""
    t = pl.program_id(0)
    n_tiles = pl.num_programs(0)
    n_chunks = gt_ref.shape[1]
    chunk_w = gt_ref.shape[3]
    cams_per_chunk = 8 * chunk_w
    inv_n = jnp.float32(1.0 / n_cams)

    sub = lax.broadcasted_iota(jnp.int32, (8, chunk_w), 0)
    lane = lax.broadcasted_iota(jnp.int32, (8, chunk_w), 1)
    local = sub * chunk_w + lane                      # camera slot within one chunk

    def valid_mask(chunk_idx):                        # padded camera slots -> False
        return (chunk_idx * cams_per_chunk + local) < n_cams

    # --------------------------------------------------------------------- init ------
    @pl.when(t == 0)
    def _init():
        tsum_ref[...] = jnp.zeros_like(tsum_ref)
        osum_ref[...] = jnp.zeros_like(osum_ref)

    # ------------- single streaming pass: t_gt / t_pred / orientation error ----------
    # Strip-mined over 128-lane chunks to bound live vregs; the 6 per-camera
    # translations are cached in VMEM so the later reduction passes never touch HBM.
    @pl.loop(0, n_chunks)
    def _stream(j):
        gidx = t * n_chunks + j                       # global chunk index
        valid = valid_mask(gidx)

        a00 = gt_ref[0, j]; a01 = gt_ref[1, j]; a02 = gt_ref[2, j]; bx = gt_ref[3, j]
        a10 = gt_ref[4, j]; a11 = gt_ref[5, j]; a12 = gt_ref[6, j]; by = gt_ref[7, j]
        a20 = gt_ref[8, j]; a21 = gt_ref[9, j]; a22 = gt_ref[10, j]; bz = gt_ref[11, j]

        # t_gt = -R_gt^T @ b
        tg0 = -(a00 * bx + a10 * by + a20 * bz)
        tg1 = -(a01 * bx + a11 * by + a21 * bz)
        tg2 = -(a02 * bx + a12 * by + a22 * bz)

        p00 = pr_ref[0, j]; p01 = pr_ref[1, j]; p02 = pr_ref[2, j]; qx = pr_ref[3, j]
        p10 = pr_ref[4, j]; p11 = pr_ref[5, j]; p12 = pr_ref[6, j]; qy = pr_ref[7, j]
        p20 = pr_ref[8, j]; p21 = pr_ref[9, j]; p22 = pr_ref[10, j]; qz = pr_ref[11, j]

        # t_pred = -R_pred^T @ q
        ts0 = -(p00 * qx + p10 * qy + p20 * qz)
        ts1 = -(p01 * qx + p11 * qy + p21 * qz)
        ts2 = -(p02 * qx + p12 * qy + p22 * qz)

        # cache per-camera translations (24 B/cam) for the later reduction passes
        base = gidx * 6
        cache_ref[base + 0] = tg0
        cache_ref[base + 1] = tg1
        cache_ref[base + 2] = tg2
        cache_ref[base + 3] = ts0
        cache_ref[base + 4] = ts1
        cache_ref[base + 5] = ts2

        tsum_ref[0] = tsum_ref[0] + jnp.where(valid, tg0, 0.0)
        tsum_ref[1] = tsum_ref[1] + jnp.where(valid, tg1, 0.0)
        tsum_ref[2] = tsum_ref[2] + jnp.where(valid, tg2, 0.0)

        # Uncalibrated orientation error.  Frobenius norms / differences are transpose
        # invariant, so un-transposed rotation blocks are used directly:
        #   min(||Vn - Vgtn||_F, ||Vn + Vgtn||_F) = sqrt(2 - 2 |<Vn, Vgtn>|)
        gss = (a00 * a00 + a01 * a01 + a02 * a02 + a10 * a10 + a11 * a11 + a12 * a12
               + a20 * a20 + a21 * a21 + a22 * a22)
        pss = (p00 * p00 + p01 * p01 + p02 * p02 + p10 * p10 + p11 * p11 + p12 * p12
               + p20 * p20 + p21 * p21 + p22 * p22)
        dot = (a00 * p00 + a01 * p01 + a02 * p02 + a10 * p10 + a11 * p11 + a12 * p12
               + a20 * p20 + a21 * p21 + a22 * p22)
        gss = jnp.where(valid, gss, 1.0)              # mask BEFORE rsqrt (padded slots)
        pss = jnp.where(valid, pss, 1.0)
        cosang = jnp.abs(dot) * (lax.rsqrt(gss) * lax.rsqrt(pss))   # EUP
        orient = jnp.sqrt(jnp.maximum(2.0 - 2.0 * cosang, 0.0))
        osum_ref[...] = osum_ref[...] + jnp.where(valid, orient, 0.0)

    # ----------- last grid step: reductions over the VMEM cache + final loss ---------
    @pl.when(t == n_tiles - 1)
    def _finalize():
        trans0 = jnp.sum(tsum_ref[0], keepdims=True) * inv_n        # (1, 1)
        trans1 = jnp.sum(tsum_ref[1], keepdims=True) * inv_n
        trans2 = jnp.sum(tsum_ref[2], keepdims=True) * inv_n

        def scale_body(g, acc):                       # scale = mean ||t_gt - trans||
            valid = valid_mask(g)
            base = g * 6
            c0 = cache_ref[base + 0] - trans0
            c1 = cache_ref[base + 1] - trans1
            c2 = cache_ref[base + 2] - trans2
            nrm = jnp.sqrt(c0 * c0 + c1 * c1 + c2 * c2)
            return acc + jnp.where(valid, nrm, 0.0)

        ssum = lax.fori_loop(0, total_chunks, scale_body,
                             jnp.zeros((8, chunk_w), jnp.float32))
        scale = jnp.sum(ssum, keepdims=True) * inv_n
        inv_scale = pl.reciprocal(scale, approx=False)   # exact: feeds every trans err

        def err_body(g, acc):                         # mean ||(t_gt-trans)/scale - ts||
            valid = valid_mask(g)
            base = g * 6
            e0 = (cache_ref[base + 0] - trans0) * inv_scale - cache_ref[base + 3]
            e1 = (cache_ref[base + 1] - trans1) * inv_scale - cache_ref[base + 4]
            e2 = (cache_ref[base + 2] - trans2) * inv_scale - cache_ref[base + 5]
            err = jnp.sqrt(e0 * e0 + e1 * e1 + e2 * e2)
            return acc + jnp.where(valid, err, 0.0)

        esum = lax.fori_loop(0, total_chunks, err_body,
                             jnp.zeros((8, chunk_w), jnp.float32))
        out_ref[...] = (jnp.sum(esum, keepdims=True)
                        + jnp.sum(osum_ref[...], keepdims=True)) * inv_n


def _pack_cameras(mats_3x4, total_chunks, chunk_w):
    """(N, 3, 4) -> (12, total_chunks, 8, chunk_w) component-major.
    Camera n sits at chunk = n // (8*chunk_w), sublane = (n % (8*chunk_w)) // chunk_w,
    lane = n % chunk_w.  A single 2-D transpose so XLA can fuse it into the input DMA."""
    n = mats_3x4.shape[0]
    n_pad = total_chunks * 8 * chunk_w
    comp = mats_3x4.reshape(n, 12).astype(jnp.float32)
    comp = jnp.pad(comp, ((0, n_pad - n), (0, 0)))     # (n_pad, 12)
    comp = comp.T                                      # (12, n_pad)
    return comp.reshape(12, total_chunks, 8, chunk_w)


def gt_loss(ps_norm, y, calibrated=False, chunk_w=128, max_chunks_per_step=16):
    """GTLoss forward.  ps_norm: (N, 3, 4) predicted cameras; y: (N, 4, 4) GT cameras."""
    if calibrated:
        # TODO(synk): calibrated branch (matrix_to_quaternion orientation error) has no
        # clean Pallas equivalent here; only the uncalibrated Frobenius branch is done.
        raise NotImplementedError("calibrated=True (quaternion orientation) not implemented")
    n = y.shape[0]
    cams_per_chunk = 8 * chunk_w
    total_chunks = pl.cdiv(n, cams_per_chunk)
    n_chunks = min(total_chunks, max_chunks_per_step)  # chunks streamed per grid step
    n_tiles = pl.cdiv(total_chunks, n_chunks)
    total_chunks_padded = n_tiles * n_chunks

    gt_packed = _pack_cameras(y[:, 0:3, 0:4], total_chunks_padded, chunk_w)
    pr_packed = _pack_cameras(ps_norm[:, 0:3, 0:4], total_chunks_padded, chunk_w)

    block = (12, n_chunks, 8, chunk_w)
    block_bytes = 12 * n_chunks * 8 * chunk_w * 4
    cache_bytes = total_chunks_padded * 6 * 8 * chunk_w * 4
    acc_bytes = 4 * 8 * chunk_w * 4
    vmem_needed = cache_bytes + 2 * 2 * block_bytes + acc_bytes + (4 << 20)
    # TODO(synk): for very large N (>~1M cameras) the per-camera VMEM cache no longer
    # fits; it would have to spill to an HBM output, and on v7x the tile axis should be
    # sharded across the two TensorCores with per-core partial sums combined outside.

    out = pl.pallas_call(
        functools.partial(_gt_loss_kernel, n_cams=n, total_chunks=total_chunks_padded),
        out_shape=jax.ShapeDtypeStruct((1, 1), jnp.float32),
        grid=(n_tiles,),
        in_specs=[
            pl.BlockSpec(block, lambda t: (0, t, 0, 0)),
            pl.BlockSpec(block, lambda t: (0, t, 0, 0)),
        ],
        out_specs=pl.BlockSpec((1, 1), lambda t: (0, 0)),
        scratch_shapes=[
            pltpu.VMEM((total_chunks_padded * 6, 8, chunk_w), jnp.float32),  # t_gt/ts cache
            pltpu.VMEM((3, 8, chunk_w), jnp.float32),                        # sum of t_gt
            pltpu.VMEM((8, chunk_w), jnp.float32),                           # orient-err sum
        ],
        compiler_params=pltpu.CompilerParams(
            dimension_semantics=("arbitrary",),
            allow_input_fusion=[True, True],
            vmem_limit_bytes=int(min(max(vmem_needed, 32 << 20), 64 << 20)),
        ),
    )(gt_packed, pr_packed)
    return out[0, 0]


def _reference_loss(ps_norm, y):
    """Pure-JAX reference mirroring the PyTorch forward (calibrated=False)."""
    n = y.shape[0]
    v_gt = jnp.transpose(y[:, 0:3, 0:3], (0, 2, 1))
    t_gt = -jnp.matmul(v_gt, y[:, 0:3, 3:4])[..., 0]
    trans = t_gt.mean(axis=0)
    scale = jnp.linalg.norm(t_gt - trans, axis=1).mean()
    t_gt = (t_gt - trans) / scale
    v_pr = jnp.transpose(ps_norm[:, 0:3, 0:3], (0, 2, 1))
    ts = -jnp.matmul(v_pr, ps_norm[:, 0:3, 3:4])[..., 0]
    tran_loss = jnp.linalg.norm(t_gt - ts, axis=1).mean()
    v_gt_n = v_gt / jnp.linalg.norm(v_gt.reshape(n, 9), axis=1)[:, None, None]
    v_pr_n = v_pr / jnp.linalg.norm(v_pr.reshape(n, 9), axis=1)[:, None, None]
    orient_err = jnp.minimum(
        jnp.linalg.norm((v_pr_n - v_gt_n).reshape(n, 9), axis=1),
        jnp.linalg.norm((v_pr_n + v_gt_n).reshape(n, 9), axis=1))
    return tran_loss + orient_err.mean()


if __name__ == "__main__":
    key_small, key_big = jax.random.split(jax.random.PRNGKey(0))

    def make_inputs(key, n):
        k1, k2, k3, k4 = jax.random.split(key, 4)
        r_gt, _ = jnp.linalg.qr(jax.random.normal(k1, (n, 3, 3), dtype=jnp.float32))
        t_col = 2.0 * jax.random.normal(k2, (n, 3, 1), dtype=jnp.float32)
        bottom = jnp.broadcast_to(jnp.array([0.0, 0.0, 0.0, 1.0], jnp.float32), (n, 1, 4))
        y = jnp.concatenate([jnp.concatenate([r_gt, t_col], axis=2), bottom], axis=1)
        r_pr = r_gt + 0.05 * jax.random.normal(k3, (n, 3, 3), dtype=jnp.float32)
        t_pr = t_col + 0.10 * jax.random.normal(k4, (n, 3, 1), dtype=jnp.float32)
        ps_norm = jnp.concatenate([r_pr, t_pr], axis=2)
        return ps_norm, y

    # Small-N regime (common camera-pose case): whole loss runs in a single grid step.
    ps12, y12 = make_inputs(key_small, 12)
    loss12 = jax.block_until_ready(jax.jit(gt_loss)(ps12, y12))
    ref12 = jax.block_until_ready(_reference_loss(ps12, y12))
    assert jnp.isfinite(loss12), "kernel produced non-finite loss"
    assert jnp.allclose(loss12, ref12, rtol=2e-3, atol=1e-4), (loss12, ref12)

    # Multi-tile regime: max_chunks_per_step=1 forces several grid steps, exercising the
    # streamed VMEM t_gt/ts cache, the last-step finalize, and padded-camera masking.
    ps_l, y_l = make_inputs(key_big, 1500)
    loss_l = jax.block_until_ready(
        jax.jit(functools.partial(gt_loss, max_chunks_per_step=1))(ps_l, y_l))
    ref_l = jax.block_until_ready(_reference_loss(ps_l, y_l))
    assert jnp.isfinite(loss_l), "kernel produced non-finite loss (multi-tile)"
    assert jnp.allclose(loss_l, ref_l, rtol=2e-3, atol=1e-4), (loss_l, ref_l)

    print("KERNEL_OK")
</pallas_src>

<mosaic_0001>
module attributes {stable_mosaic.version = 11 : i64} {
  func.func @_gt_loss_kernel(%arg0: i32, %arg1: memref<12x1x8x128xf32, #tpu.memory_space<vmem>>, %arg2: memref<12x1x8x128xf32, #tpu.memory_space<vmem>>, %arg3: memref<1x1xf32, #tpu.memory_space<vmem>>, %arg4: memref<6x8x128xf32, #tpu.memory_space<vmem>>, %arg5: memref<3x8x128xf32, #tpu.memory_space<vmem>>, %arg6: memref<8x128xf32, #tpu.memory_space<vmem>>) attributes {dimension_semantics = [#tpu.dimension_semantics<arbitrary>], iteration_bounds = array<i64: 1>, scalar_prefetch = 0 : i64, scratch_operands = 3 : i64, tpu.core_type = #tpu.core_type<tc>, window_params = [{transform_indices = @transform_0, window_bounds = array<i64: 12, 1, 8, 128>}, {transform_indices = @transform_1, window_bounds = array<i64: 12, 1, 8, 128>}, {pipeline_mode = #tpu.pipeline_mode<synchronous>, transform_indices = @transform_2, window_bounds = array<i64: 1, 1>}]} {
    %0 = tpu.iota {dimensions = array<i32: 0>} : vector<8x128xi32>
    %1 = tpu.iota {dimensions = array<i32: 1>} : vector<8x128xi32>
    %c128_i32 = arith.constant 128 : i32
    %2 = vector.broadcast %c128_i32 : i32 to vector<8x128xi32>
    %3 = arith.muli %0, %2 : vector<8x128xi32>
    %4 = arith.addi %3, %1 : vector<8x128xi32>
    %c0_i32 = arith.constant 0 : i32
    %5 = arith.cmpi eq, %arg0, %c0_i32 : i32
    %6 = arith.extui %5 : i1 to i32
    %c0_i32_0 = arith.constant 0 : i32
    %7 = arith.cmpi ne, %6, %c0_i32_0 : i32
    scf.if %7 {
      %cst_118 = arith.constant 0.000000e+00 : f32
      %261 = vector.broadcast %cst_118 : f32 to vector<3x8x128xf32>
      %c0_119 = arith.constant 0 : index
      %c0_120 = arith.constant 0 : index
      %c0_121 = arith.constant 0 : index
      %262 = vector.load %arg5[%c0_119, %c0_120, %c0_121] : memref<3x8x128xf32, #tpu.memory_space<vmem>>, vector<3x8x128xf32>
      tpu.vector_store %arg5[%c0_119, %c0_120, %c0_121], %261 {strides = array<i32>} : memref<3x8x128xf32, #tpu.memory_space<vmem>>, vector<3x8x128xf32>,
      %cst_122 = arith.constant 0.000000e+00 : f32
      %263 = vector.broadcast %cst_122 : f32 to vector<8x128xf32>
      %c0_123 = arith.constant 0 : index
      %c0_124 = arith.constant 0 : index
      %264 = vector.load %arg6[%c0_123, %c0_124] : memref<8x128xf32, #tpu.memory_space<vmem>>, vector<8x128xf32>
      tpu.vector_store %arg6[%c0_123, %c0_124], %263 {strides = array<i32>} : memref<8x128xf32, #tpu.memory_space<vmem>>, vector<8x128xf32>,
    } else {
    }
    %c0_i32_1 = arith.constant 0 : i32
    %c1_i32 = arith.constant 1 : i32
    %8 = arith.muli %c0_i32_1, %c1_i32 : i32
    %c0_i32_2 = arith.constant 0 : i32
    %9 = arith.addi %c0_i32_2, %8 : i32
    %c1_i32_3 = arith.constant 1 : i32
    %10 = arith.muli %arg0, %c1_i32_3 : i32
    %11 = arith.addi %10, %9 : i32
    %c1024_i32 = arith.constant 1024 : i32
    %12 = arith.muli %11, %c1024_i32 : i32
    %13 = vector.broadcast %12 : i32 to vector<8x128xi32>
    %14 = arith.addi %13, %4 : vector<8x128xi32>
    %c12_i32 = arith.constant 12 : i32
    %15 = vector.broadcast %c12_i32 : i32 to vector<8x128xi32>
    %16 = arith.cmpi slt, %14, %15 : vector<8x128xi32>
    %c0 = arith.constant 0 : index
    %17 = arith.index_cast %9 : i32 to index
    %c0_4 = arith.constant 0 : index
    %c0_5 = arith.constant 0 : index
    %18 = vector.load %arg1[%c0, %17, %c0_4, %c0_5] : memref<12x1x8x128xf32, #tpu.memory_space<vmem>>, vector<1x1x8x128xf32>
    %19 = vector.shape_cast %18 : vector<1x1x8x128xf32> to vector<8x128xf32>
    %c1 = arith.constant 1 : index
    %20 = arith.index_cast %9 : i32 to index
    %c0_6 = arith.constant 0 : index
    %c0_7 = arith.constant 0 : index
    %21 = vector.load %arg1[%c1, %20, %c0_6, %c0_7] : memref<12x1x8x128xf32, #tpu.memory_space<vmem>>, vector<1x1x8x128xf32>
    %22 = vector.shape_cast %21 : vector<1x1x8x128xf32> to vector<8x128xf32>
    %c2 = arith.constant 2 : index
    %23 = arith.index_cast %9 : i32 to index
    %c0_8 = arith.constant 0 : index
    %c0_9 = arith.constant 0 : index
    %24 = vector.load %arg1[%c2, %23, %c0_8, %c0_9] : memref<12x1x8x128xf32, #tpu.memory_space<vmem>>, vector<1x1x8x128xf32>
    %25 = vector.shape_cast %24 : vector<1x1x8x128xf32> to vector<8x128xf32>
    %c3 = arith.constant 3 : index
    %26 = arith.index_cast %9 : i32 to index
    %c0_10 = arith.constant 0 : index
    %c0_11 = arith.constant 0 : index
    %27 = vector.load %arg1[%c3, %26, %c0_10, %c0_11] : memref<12x1x8x128xf32, #tpu.memory_space<vmem>>, vector<1x1x8x128xf32>
    %28 = vector.shape_cast %27 : vector<1x1x8x128xf32> to vector<8x128xf32>
    %c4 = arith.constant 4 : index
    %29 = arith.index_cast %9 : i32 to index
    %c0_12 = arith.constant 0 : index
    %c0_13 = arith.constant 0 : index
    %30 = vector.load %arg1[%c4, %29, %c0_12, %c0_13] : memref<12x1x8x128xf32, #tpu.memory_space<vmem>>, vector<1x1x8x128xf32>
    %31 = vector.shape_cast %30 : vector<1x1x8x128xf32> to vector<8x128xf32>
    %c5 = arith.constant 5 : index
    %32 = arith.index_cast %9 : i32 to index
    %c0_14 = arith.constant 0 : index
    %c0_15 = arith.constant 0 : index
    %33 = vector.load %arg1[%c5, %32, %c0_14, %c0_15] : memref<12x1x8x128xf32, #tpu.memory_space<vmem>>, vector<1x1x8x128xf32>
    %34 = vector.shape_cast %33 : vector<1x1x8x128xf32> to vector<8x128xf32>
    %c6 = arith.constant 6 : index
    %35 = arith.index_cast %9 : i32 to index
    %c0_16 = arith.constant 0 : index
    %c0_17 = arith.constant 0 : index
    %36 = vector.load %arg1[%c6, %35, %c0_16, %c0_17] : memref<12x1x8x128xf32, #tpu.memory_space<vmem>>, vector<1x1x8x128xf32>
    %37 = vector.shape_cast %36 : vector<1x1x8x128xf32> to vector<8x128xf32>
    %c7 = arith.constant 7 : index
    %38 = arith.index_cast %9 : i32 to index
    %c0_18 = arith.constant 0 : index
    %c0_19 = arith.constant 0 : index
    %39 = vector.load %arg1[%c7, %38, %c0_18, %c0_19] : memref<12x1x8x128xf32, #tpu.memory_space<vmem>>, vector<1x1x8x128xf32>
    %40 = vector.shape_cast %39 : vector<1x1x8x128xf32> to vector<8x128xf32>
    %c8 = arith.constant 8 : index
    %41 = arith.index_cast %9 : i32 to index
    %c0_20 = arith.constant 0 : index
    %c0_21 = arith.constant 0 : index
    %42 = vector.load %arg1[%c8, %41, %c0_20, %c0_21] : memref<12x1x8x128xf32, #tpu.memory_space<vmem>>, vector<1x1x8x128xf32>
    %43 = vector.shape_cast %42 : vector<1x1x8x128xf32> to vector<8x128xf32>
    %c9 = arith.constant 9 : index
    %44 = arith.index_cast %9 : i32 to index
    %c0_22 = arith.constant 0 : index
    %c0_23 = arith.constant 0 : index
    %45 = vector.load %arg1[%c9, %44, %c0_22, %c0_23] : memref<12x1x8x128xf32, #tpu.memory_space<vmem>>, vector<1x1x8x128xf32>
    %46 = vector.shape_cast %45 : vector<1x1x8x128xf32> to vector<8x128xf32>
    %c10 = arith.constant 10 : index
    %47 = arith.index_cast %9 : i32 to index
    %c0_24 = arith.constant 0 : index
    %c0_25 = arith.constant 0 : index
    %48 = vector.load %arg1[%c10, %47, %c0_24, %c0_25] : memref<12x1x8x128xf32, #tpu.memory_space<vmem>>, vector<1x1x8x128xf32>
    %49 = vector.shape_cast %48 : vector<1x1x8x128xf32> to vector<8x128xf32>
    %c11 = arith.constant 11 : index
    %50 = arith.index_cast %9 : i32 to index
    %c0_26 = arith.constant 0 : index
    %c0_27 = arith.constant 0 : index
    %51 = vector.load %arg1[%c11, %50, %c0_26, %c0_27] : memref<12x1x8x128xf32, #tpu.memory_space<vmem>>, vector<1x1x8x128xf32>
    %52 = vector.shape_cast %51 : vector<1x1x8x128xf32> to vector<8x128xf32>
    %53 = arith.mulf %19, %28 : vector<8x128xf32>
    %54 = arith.mulf %31, %40 : vector<8x128xf32>
    %55 = arith.addf %53, %54 : vector<8x128xf32>
    %56 = arith.mulf %43, %52 : vector<8x128xf32>
    %57 = arith.addf %55, %56 : vector<8x128xf32>
    %cst = arith.constant 0.000000e+00 : f32
    %58 = vector.broadcast %cst : f32 to vector<8x128xf32>
    %59 = arith.subf %58, %57 : vector<8x128xf32>
    %60 = arith.mulf %22, %28 : vector<8x128xf32>
    %61 = arith.mulf %34, %40 : vector<8x128xf32>
    %62 = arith.addf %60, %61 : vector<8x128xf32>
    %63 = arith.mulf %46, %52 : vector<8x128xf32>
    %64 = arith.addf %62, %63 : vector<8x128xf32>
    %cst_28 = arith.constant 0.000000e+00 : f32
    %65 = vector.broadcast %cst_28 : f32 to vector<8x128xf32>
    %66 = arith.subf %65, %64 : vector<8x128xf32>
    %67 = arith.mulf %25, %28 : vector<8x128xf32>
    %68 = arith.mulf %37, %40 : vector<8x128xf32>
    %69 = arith.addf %67, %68 : vector<8x128xf32>
    %70 = arith.mulf %49, %52 : vector<8x128xf32>
    %71 = arith.addf %69, %70 : vector<8x128xf32>
    %cst_29 = arith.constant 0.000000e+00 : f32
    %72 = vector.broadcast %cst_29 : f32 to vector<8x128xf32>
    %73 = arith.subf %72, %71 : vector<8x128xf32>
    %c0_30 = arith.constant 0 : index
    %74 = arith.index_cast %9 : i32 to index
    %c0_31 = arith.constant 0 : index
    %c0_32 = arith.constant 0 : index
    %75 = vector.load %arg2[%c0_30, %74, %c0_31, %c0_32] : memref<12x1x8x128xf32, #tpu.memory_space<vmem>>, vector<1x1x8x128xf32>
    %76 = vector.shape_cast %75 : vector<1x1x8x128xf32> to vector<8x128xf32>
    %c1_33 = arith.constant 1 : index
    %77 = arith.index_cast %9 : i32 to index
    %c0_34 = arith.constant 0 : index
    %c0_35 = arith.constant 0 : index
    %78 = vector.load %arg2[%c1_33, %77, %c0_34, %c0_35] : memref<12x1x8x128xf32, #tpu.memory_space<vmem>>, vector<1x1x8x128xf32>
    %79 = vector.shape_cast %78 : vector<1x1x8x128xf32> to vector<8x128xf32>
    %c2_36 = arith.constant 2 : index
    %80 = arith.index_cast %9 : i32 to index
    %c0_37 = arith.constant 0 : index
    %c0_38 = arith.constant 0 : index
    %81 = vector.load %arg2[%c2_36, %80, %c0_37, %c0_38] : memref<12x1x8x128xf32, #tpu.memory_space<vmem>>, vector<1x1x8x128xf32>
    %82 = vector.shape_cast %81 : vector<1x1x8x128xf32> to vector<8x128xf32>
    %c3_39 = arith.constant 3 : index
    %83 = arith.index_cast %9 : i32 to index
    %c0_40 = arith.constant 0 : index
    %c0_41 = arith.constant 0 : index
    %84 = vector.load %arg2[%c3_39, %83, %c0_40, %c0_41] : memref<12x1x8x128xf32, #tpu.memory_space<vmem>>, vector<1x1x8x128xf32>
    %85 = vector.shape_cast %84 : vector<1x1x8x128xf32> to vector<8x128xf32>
    %c4_42 = arith.constant 4 : index
    %86 = arith.index_cast %9 : i32 to index
    %c0_43 = arith.constant 0 : index
    %c0_44 = arith.constant 0 : index
    %87 = vector.load %arg2[%c4_42, %86, %c0_43, %c0_44] : memref<12x1x8x128xf32, #tpu.memory_space<vmem>>, vector<1x1x8x128xf32>
    %88 = vector.shape_cast %87 : vector<1x1x8x128xf32> to vector<8x128xf32>
    %c5_45 = arith.constant 5 : index
    %89 = arith.index_cast %9 : i32 to index
    %c0_46 = arith.constant 0 : index
    %c0_47 = arith.constant 0 : index
    %90 = vector.load %arg2[%c5_45, %89, %c0_46, %c0_47] : memref<12x1x8x128xf32, #tpu.memory_space<vmem>>, vector<1x1x8x128xf32>
    %91 = vector.shape_cast %90 : vector<1x1x8x128xf32> to vector<8x128xf32>
    %c6_48 = arith.constant 6 : index
    %92 = arith.index_cast %9 : i32 to index
    %c0_49 = arith.constant 0 : index
    %c0_50 = arith.constant 0 : index
    %93 = vector.load %arg2[%c6_48, %92, %c0_49, %c0_50] : memref<12x1x8x128xf32, #tpu.memory_space<vmem>>, vector<1x1x8x128xf32>
    %94 = vector.shape_cast %93 : vector<1x1x8x128xf32> to vector<8x128xf32>
    %c7_51 = arith.constant 7 : index
    %95 = arith.index_cast %9 : i32 to index
    %c0_52 = arith.constant 0 : index
    %c0_53 = arith.constant 0 : index
    %96 = vector.load %arg2[%c7_51, %95, %c0_52, %c0_53] : memref<12x1x8x128xf32, #tpu.memory_space<vmem>>, vector<1x1x8x128xf32>
    %97 = vector.shape_cast %96 : vector<1x1x8x128xf32> to vector<8x128xf32>
    %c8_54 = arith.constant 8 : index
    %98 = arith.index_cast %9 : i32 to index
    %c0_55 = arith.constant 0 : index
    %c0_56 = arith.constant 0 : index
    %99 = vector.load %arg2[%c8_54, %98, %c0_55, %c0_56] : memref<12x1x8x128xf32, #tpu.memory_space<vmem>>, vector<1x1x8x128xf32>
    %100 = vector.shape_cast %99 : vector<1x1x8x128xf32> to vector<8x128xf32>
    %c9_57 = arith.constant 9 : index
    %101 = arith.index_cast %9 : i32 to index
    %c0_58 = arith.constant 0 : index
    %c0_59 = arith.constant 0 : index
    %102 = vector.load %arg2[%c9_57, %101, %c0_58, %c0_59] : memref<12x1x8x128xf32, #tpu.memory_space<vmem>>, vector<1x1x8x128xf32>
    %103 = vector.shape_cast %102 : vector<1x1x8x128xf32> to vector<8x128xf32>
    %c10_60 = arith.constant 10 : index
    %104 = arith.index_cast %9 : i32 to index
    %c0_61 = arith.constant 0 : index
    %c0_62 = arith.constant 0 : index
    %105 = vector.load %arg2[%c10_60, %104, %c0_61, %c0_62] : memref<12x1x8x128xf32, #tpu.memory_space<vmem>>, vector<1x1x8x128xf32>
    %106 = vector.shape_cast %105 : vector<1x1x8x128xf32> to vector<8x128xf32>
    %c11_63 = arith.constant 11 : index
    %107 = arith.index_cast %9 : i32 to index
    %c0_64 = arith.constant 0 : index
    %c0_65 = arith.constant 0 : index
    %108 = vector.load %arg2[%c11_63, %107, %c0_64, %c0_65] : memref<12x1x8x128xf32, #tpu.memory_space<vmem>>, vector<1x1x8x128xf32>
    %109 = vector.shape_cast %108 : vector<1x1x8x128xf32> to vector<8x128xf32>
    %110 = arith.mulf %76, %85 : vector<8x128xf32>
    %111 = arith.mulf %88, %97 : vector<8x128xf32>
    %112 = arith.addf %110, %111 : vector<8x128xf32>
    %113 = arith.mulf %100, %109 : vector<8x128xf32>
    %114 = arith.addf %112, %113 : vector<8x128xf32>
    %cst_66 = arith.constant 0.000000e+00 : f32
    %115 = vector.broadcast %cst_66 : f32 to vector<8x128xf32>
    %116 = arith.subf %115, %114 : vector<8x128xf32>
    %117 = arith.mulf %79, %85 : vector<8x128xf32>
    %118 = arith.mulf %91, %97 : vector<8x128xf32>
    %119 = arith.addf %117, %118 : vector<8x128xf32>
    %120 = arith.mulf %103, %109 : vector<8x128xf32>
    %121 = arith.addf %119, %120 : vector<8x128xf32>
    %cst_67 = arith.constant 0.000000e+00 : f32
    %122 = vector.broadcast %cst_67 : f32 to vector<8x128xf32>
    %123 = arith.subf %122, %121 : vector<8x128xf32>
    %124 = arith.mulf %82, %85 : vector<8x128xf32>
    %125 = arith.mulf %94, %97 : vector<8x128xf32>
    %126 = arith.addf %124, %125 : vector<8x128xf32>
    %127 = arith.mulf %106, %109 : vector<8x128xf32>
    %128 = arith.addf %126, %127 : vector<8x128xf32>
    %cst_68 = arith.constant 0.000000e+00 : f32
    %129 = vector.broadcast %cst_68 : f32 to vector<8x128xf32>
    %130 = arith.subf %129, %128 : vector<8x128xf32>
    %c6_i32 = arith.constant 6 : i32
    %131 = arith.muli %11, %c6_i32 : i32
    %c0_i32_69 = arith.constant 0 : i32
    %132 = arith.addi %131, %c0_i32_69 : i32
    %133 = arith.index_cast %132 : i32 to index
    %c0_70 = arith.constant 0 : index
    %c0_71 = arith.constant 0 : index
    %134 = vector.load %arg4[%133, %c0_70, %c0_71] : memref<6x8x128xf32, #tpu.memory_space<vmem>>, vector<1x8x128xf32>
    %135 = vector.shape_cast %134 : vector<1x8x128xf32> to vector<8x128xf32>
    %136 = vector.shape_cast %59 : vector<8x128xf32> to vector<1x8x128xf32>
    tpu.vector_store %arg4[%133, %c0_70, %c0_71], %136 {strides = array<i32>} : memref<6x8x128xf32, #tpu.memory_space<vmem>>, vector<1x8x128xf32>,
    %c1_i32_72 = arith.constant 1 : i32
    %137 = arith.addi %131, %c1_i32_72 : i32
    %138 = arith.index_cast %137 : i32 to index
    %c0_73 = arith.constant 0 : index
    %c0_74 = arith.constant 0 : index
    %139 = vector.load %arg4[%138, %c0_73, %c0_74] : memref<6x8x128xf32, #tpu.memory_space<vmem>>, vector<1x8x128xf32>
    %140 = vector.shape_cast %139 : vector<1x8x128xf32> to vector<8x128xf32>
    %141 = vector.shape_cast %66 : vector<8x128xf32> to vector<1x8x128xf32>
    tpu.vector_store %arg4[%138, %c0_73, %c0_74], %141 {strides = array<i32>} : memref<6x8x128xf32, #tpu.memory_space<vmem>>, vector<1x8x128xf32>,
    %c2_i32 = arith.constant 2 : i32
    %142 = arith.addi %131, %c2_i32 : i32
    %143 = arith.index_cast %142 : i32 to index
    %c0_75 = arith.constant 0 : index
    %c0_76 = arith.constant 0 : index
    %144 = vector.load %arg4[%143, %c0_75, %c0_76] : memref<6x8x128xf32, #tpu.memory_space<vmem>>, vector<1x8x128xf32>
    %145 = vector.shape_cast %144 : vector<1x8x128xf32> to vector<8x128xf32>
    %146 = vector.shape_cast %73 : vector<8x128xf32> to vector<1x8x128xf32>
    tpu.vector_store %arg4[%143, %c0_75, %c0_76], %146 {strides = array<i32>} : memref<6x8x128xf32, #tpu.memory_space<vmem>>, vector<1x8x128xf32>,
    %c3_i32 = arith.constant 3 : i32
    %147 = arith.addi %131, %c3_i32 : i32
    %148 = arith.index_cast %147 : i32 to index
    %c0_77 = arith.constant 0 : index
    %c0_78 = arith.constant 0 : index
    %149 = vector.load %arg4[%148, %c0_77, %c0_78] : memref<6x8x128xf32, #tpu.memory_space<vmem>>, vector<1x8x128xf32>
    %150 = vector.shape_cast %149 : vector<1x8x128xf32> to vector<8x128xf32>
    %151 = vector.shape_cast %116 : vector<8x128xf32> to vector<1x8x128xf32>
    tpu.vector_store %arg4[%148, %c0_77, %c0_78], %151 {strides = array<i32>} : memref<6x8x128xf32, #tpu.memory_space<vmem>>, vector<1x8x128xf32>,
    %c4_i32 = arith.constant 4 : i32
    %152 = arith.addi %131, %c4_i32 : i32
    %153 = arith.index_cast %152 : i32 to index
    %c0_79 = arith.constant 0 : index
    %c0_80 = arith.constant 0 : index
    %154 = vector.load %arg4[%153, %c0_79, %c0_80] : memref<6x8x128xf32, #tpu.memory_space<vmem>>, vector<1x8x128xf32>
    %155 = vector.shape_cast %154 : vector<1x8x128xf32> to vector<8x128xf32>
    %156 = vector.shape_cast %123 : vector<8x128xf32> to vector<1x8x128xf32>
    tpu.vector_store %arg4[%153, %c0_79, %c0_80], %156 {strides = array<i32>} : memref<6x8x128xf32, #tpu.memory_space<vmem>>, vector<1x8x128xf32>,
    %c5_i32 = arith.constant 5 : i32
    %157 = arith.addi %131, %c5_i32 : i32
    %158 = arith.index_cast %157 : i32 to index
    %c0_81 = arith.constant 0 : index
    %c0_82 = arith.constant 0 : index
    %159 = vector.load %arg4[%158, %c0_81, %c0_82] : memref<6x8x128xf32, #tpu.memory_space<vmem>>, vector<1x8x128xf32>
    %160 = vector.shape_cast %159 : vector<1x8x128xf32> to vector<8x128xf32>
    %161 = vector.shape_cast %130 : vector<8x128xf32> to vector<1x8x128xf32>
    tpu.vector_store %arg4[%158, %c0_81, %c0_82], %161 {strides = array<i32>} : memref<6x8x128xf32, #tpu.memory_space<vmem>>, vector<1x8x128xf32>,
    %c0_83 = arith.constant 0 : index
    %c0_84 = arith.constant 0 : index
    %c0_85 = arith.constant 0 : index
    %162 = vector.load %arg5[%c0_83, %c0_84, %c0_85] : memref<3x8x128xf32, #tpu.memory_space<vmem>>, vector<1x8x128xf32>
    %163 = vector.shape_cast %162 : vector<1x8x128xf32> to vector<8x128xf32>
    %cst_86 = arith.constant 0.000000e+00 : f32
    %164 = vector.broadcast %cst_86 : f32 to vector<8x128xf32>
    %165 = arith.select %16, %59, %164 : vector<8x128xi1>, vector<8x128xf32>
    %166 = arith.addf %163, %165 : vector<8x128xf32>
    %c0_87 = arith.constant 0 : index
    %c0_88 = arith.constant 0 : index
    %c0_89 = arith.constant 0 : index
    %167 = vector.load %arg5[%c0_87, %c0_88, %c0_89] : memref<3x8x128xf32, #tpu.memory_space<vmem>>, vector<1x8x128xf32>
    %168 = vector.shape_cast %167 : vector<1x8x128xf32> to vector<8x128xf32>
    %169 = vector.shape_cast %166 : vector<8x128xf32> to vector<1x8x128xf32>
    tpu.vector_store %arg5[%c0_87, %c0_88, %c0_89], %169 {strides = array<i32>} : memref<3x8x128xf32, #tpu.memory_space<vmem>>, vector<1x8x128xf32>,
    %c1_90 = arith.constant 1 : index
    %c0_91 = arith.constant 0 : index
    %c0_92 = arith.constant 0 : index
    %170 = vector.load %arg5[%c1_90, %c0_91, %c0_92] : memref<3x8x128xf32, #tpu.memory_space<vmem>>, vector<1x8x128xf32>
    %171 = vector.shape_cast %170 : vector<1x8x128xf32> to vector<8x128xf32>
    %cst_93 = arith.constant 0.000000e+00 : f32
    %172 = vector.broadcast %cst_93 : f32 to vector<8x128xf32>
    %173 = arith.select %16, %66, %172 : vector<8x128xi1>, vector<8x128xf32>
    %174 = arith.addf %171, %173 : vector<8x128xf32>
    %c1_94 = arith.constant 1 : index
    %c0_95 = arith.constant 0 : index
    %c0_96 = arith.constant 0 : index
    %175 = vector.load %arg5[%c1_94, %c0_95, %c0_96] : memref<3x8x128xf32, #tpu.memory_space<vmem>>, vector<1x8x128xf32>
    %176 = vector.shape_cast %175 : vector<1x8x128xf32> to vector<8x128xf32>
    %177 = vector.shape_cast %174 : vector<8x128xf32> to vector<1x8x128xf32>
    tpu.vector_store %arg5[%c1_94, %c0_95, %c0_96], %177 {strides = array<i32>} : memref<3x8x128xf32, #tpu.memory_space<vmem>>, vector<1x8x128xf32>,
    %c2_97 = arith.constant 2 : index
    %c0_98 = arith.constant 0 : index
    %c0_99 = arith.constant 0 : index
    %178 = vector.load %arg5[%c2_97, %c0_98, %c0_99] : memref<3x8x128xf32, #tpu.memory_space<vmem>>, vector<1x8x128xf32>
    %179 = vector.shape_cast %178 : vector<1x8x128xf32> to vector<8x128xf32>
    %cst_100 = arith.constant 0.000000e+00 : f32
    %180 = vector.broadcast %cst_100 : f32 to vector<8x128xf32>
    %181 = arith.select %16, %73, %180 : vector<8x128xi1>, vector<8x128xf32>
    %182 = arith.addf %179, %181 : vector<8x128xf32>
    %c2_101 = arith.constant 2 : index
    %c0_102 = arith.constant 0 : index
    %c0_103 = arith.constant 0 : index
    %183 = vector.load %arg5[%c2_101, %c0_102, %c0_103] : memref<3x8x128xf32, #tpu.memory_space<vmem>>, vector<1x8x128xf32>
    %184 = vector.shape_cast %183 : vector<1x8x128xf32> to vector<8x128xf32>
    %185 = vector.shape_cast %182 : vector<8x128xf32> to vector<1x8x128xf32>
    tpu.vector_store %arg5[%c2_101, %c0_102, %c0_103], %185 {strides = array<i32>} : memref<3x8x128xf32, #tpu.memory_space<vmem>>, vector<1x8x128xf32>,
    %186 = arith.mulf %19, %19 : vector<8x128xf32>
    %187 = arith.mulf %22, %22 : vector<8x128xf32>
    %188 = arith.addf %186, %187 : vector<8x128xf32>
    %189 = arith.mulf %25, %25 : vector<8x128xf32>
    %190 = arith.addf %188, %189 : vector<8x128xf32>
    %191 = arith.mulf %31, %31 : vector<8x128xf32>
    %192 = arith.addf %190, %191 : vector<8x128xf32>
    %193 = arith.mulf %34, %34 : vector<8x128xf32>
    %194 = arith.addf %192, %193 : vector<8x128xf32>
    %195 = arith.mulf %37, %37 : vector<8x128xf32>
    %196 = arith.addf %194, %195 : vector<8x128xf32>
    %197 = arith.mulf %43, %43 : vector<8x128xf32>
    %198 = arith.addf %196, %197 : vector<8x128xf32>
    %199 = arith.mulf %46, %46 : vector<8x128xf32>
    %200 = arith.addf %198, %199 : vector<8x128xf32>
    %201 = arith.mulf %49, %49 : vector<8x128xf32>
    %202 = arith.addf %200, %201 : vector<8x128xf32>
    %203 = arith.mulf %76, %76 : vector<8x128xf32>
    %204 = arith.mulf %79, %79 : vector<8x128xf32>
    %205 = arith.addf %203, %204 : vector<8x128xf32>
    %206 = arith.mulf %82, %82 : vector<8x128xf32>
    %207 = arith.addf %205, %206 : vector<8x128xf32>
    %208 = arith.mulf %88, %88 : vector<8x128xf32>
    %209 = arith.addf %207, %208 : vector<8x128xf32>
    %210 = arith.mulf %91, %91 : vector<8x128xf32>
    %211 = arith.addf %209, %210 : vector<8x128xf32>
    %212 = arith.mulf %94, %94 : vector<8x128xf32>
    %213 = arith.addf %211, %212 : vector<8x128xf32>
    %214 = arith.mulf %100, %100 : vector<8x128xf32>
    %215 = arith.addf %213, %214 : vector<8x128xf32>
    %216 = arith.mulf %103, %103 : vector<8x128xf32>
    %217 = arith.addf %215, %216 : vector<8x128xf32>
    %218 = arith.mulf %106, %106 : vector<8x128xf32>
    %219 = arith.addf %217, %218 : vector<8x128xf32>
    %220 = arith.mulf %19, %76 : vector<8x128xf32>
    %221 = arith.mulf %22, %79 : vector<8x128xf32>
    %222 = arith.addf %220, %221 : vector<8x128xf32>
    %223 = arith.mulf %25, %82 : vector<8x128xf32>
    %224 = arith.addf %222, %223 : vector<8x128xf32>
    %225 = arith.mulf %31, %88 : vector<8x128xf32>
    %226 = arith.addf %224, %225 : vector<8x128xf32>
    %227 = arith.mulf %34, %91 : vector<8x128xf32>
    %228 = arith.addf %226, %227 : vector<8x128xf32>
    %229 = arith.mulf %37, %94 : vector<8x128xf32>
    %230 = arith.addf %228, %229 : vector<8x128xf32>
    %231 = arith.mulf %43, %100 : vector<8x128xf32>
    %232 = arith.addf %230, %231 : vector<8x128xf32>
    %233 = arith.mulf %46, %103 : vector<8x128xf32>
    %234 = arith.addf %232, %233 : vector<8x128xf32>
    %235 = arith.mulf %49, %106 : vector<8x128xf32>
    %236 = arith.addf %234, %235 : vector<8x128xf32>
    %cst_104 = arith.constant 1.000000e+00 : f32
    %237 = vector.broadcast %cst_104 : f32 to vector<8x128xf32>
    %238 = arith.select %16, %202, %237 : vector<8x128xi1>, vector<8x128xf32>
    %cst_105 = arith.constant 1.000000e+00 : f32
    %239 = vector.broadcast %cst_105 : f32 to vector<8x128xf32>
    %240 = arith.select %16, %219, %239 : vector<8x128xi1>, vector<8x128xf32>
    %241 = math.absf %236 : vector<8x128xf32>
    %242 = math.rsqrt %238 : vector<8x128xf32>
    %243 = math.rsqrt %240 : vector<8x128xf32>
    %244 = arith.mulf %242, %243 : vector<8x128xf32>
    %245 = arith.mulf %241, %244 : vector<8x128xf32>
    %cst_106 = arith.constant 2.000000e+00 : f32
    %246 = vector.broadcast %cst_106 : f32 to vector<8x128xf32>
    %247 = arith.mulf %246, %245 : vector<8x128xf32>
    %cst_107 = arith.constant 2.000000e+00 : f32
    %248 = vector.broadcast %cst_107 : f32 to vector<8x128xf32>
    %249 = arith.subf %248, %247 : vector<8x128xf32>
    %cst_108 = arith.constant 0.000000e+00 : f32
    %250 = vector.broadcast %cst_108 : f32 to vector<8x128xf32>
    %251 = arith.maximumf %249, %250 : vector<8x128xf32>
    %252 = math.sqrt %251 : vector<8x128xf32>
    %c0_109 = arith.constant 0 : index
    %c0_110 = arith.constant 0 : index
    %253 = vector.load %arg6[%c0_109, %c0_110] : memref<8x128xf32, #tpu.memory_space<vmem>>, vector<8x128xf32>
    %cst_111 = arith.constant 0.000000e+00 : f32
    %254 = vector.broadcast %cst_111 : f32 to vector<8x128xf32>
    %255 = arith.select %16, %252, %254 : vector<8x128xi1>, vector<8x128xf32>
    %256 = arith.addf %253, %255 : vector<8x128xf32>
    %c0_112 = arith.constant 0 : index
    %c0_113 = arith.constant 0 : index
    %257 = vector.load %arg6[%c0_112, %c0_113] : memref<8x128xf32, #tpu.memory_space<vmem>>, vector<8x128xf32>
    tpu.vector_store %arg6[%c0_112, %c0_113], %256 {strides = array<i32>} : memref<8x128xf32, #tpu.memory_space<vmem>>, vector<8x128xf32>,
    %c1_i32_114 = arith.constant 1 : i32
    %c0_i32_115 = arith.constant 0 : i32
    %258 = arith.cmpi eq, %arg0, %c0_i32_115 : i32
    %259 = arith.extui %258 : i1 to i32
    %cst_116 = arith.constant 0.0833333358 : f32
    %c0_i32_117 = arith.constant 0 : i32
    %260 = arith.cmpi ne, %259, %c0_i32_117 : i32
    scf.if %260 {
      %c0_118 = arith.constant 0 : index
      %c0_119 = arith.constant 0 : index
      %c0_120 = arith.constant 0 : index
      %261 = vector.load %arg5[%c0_118, %c0_119, %c0_120] : memref<3x8x128xf32, #tpu.memory_space<vmem>>, vector<1x8x128xf32>
      %262 = vector.shape_cast %261 : vector<1x8x128xf32> to vector<8x128xf32>
      %263 = vector.shape_cast %262 : vector<8x128xf32> to vector<1x8x128xf32>
      %cst_121 = arith.constant dense<0.000000e+00> : vector<1xf32>
      %264 = vector.multi_reduction <add>, %263, %cst_121 [1, 2] : vector<1x8x128xf32> to vector<1xf32>
      %265 = vector.shape_cast %264 : vector<1xf32> to vector<1x1x1xf32>
      %266 = vector.extract %265[0, 0, 0] : f32 from vector<1x1x1xf32>
      %267 = vector.broadcast %266 : f32 to vector<1x1xf32>
      %268 = vector.broadcast %cst_116 : f32 to vector<1x1xf32>
      %269 = arith.mulf %267, %268 : vector<1x1xf32>
      %c1_122 = arith.constant 1 : index
      %c0_123 = arith.constant 0 : index
      %c0_124 = arith.constant 0 : index
      %270 = vector.load %arg5[%c1_122, %c0_123, %c0_124] : memref<3x8x128xf32, #tpu.memory_space<vmem>>, vector<1x8x128xf32>
      %271 = vector.shape_cast %270 : vector<1x8x128xf32> to vector<8x128xf32>
      %272 = vector.shape_cast %271 : vector<8x128xf32> to vector<1x8x128xf32>
      %cst_125 = arith.constant dense<0.000000e+00> : vector<1xf32>
      %273 = vector.multi_reduction <add>, %272, %cst_125 [1, 2] : vector<1x8x128xf32> to vector<1xf32>
      %274 = vector.shape_cast %273 : vector<1xf32> to vector<1x1x1xf32>
      %275 = vector.extract %274[0, 0, 0] : f32 from vector<1x1x1xf32>
      %276 = vector.broadcast %275 : f32 to vector<1x1xf32>
      %277 = vector.broadcast %cst_116 : f32 to vector<1x1xf32>
      %278 = arith.mulf %276, %277 : vector<1x1xf32>
      %c2_126 = arith.constant 2 : index
      %c0_127 = arith.constant 0 : index
      %c0_128 = arith.constant 0 : index
      %279 = vector.load %arg5[%c2_126, %c0_127, %c0_128] : memref<3x8x128xf32, #tpu.memory_space<vmem>>, vector<1x8x128xf32>
      %280 = vector.shape_cast %279 : vector<1x8x128xf32> to vector<8x128xf32>
      %281 = vector.shape_cast %280 : vector<8x128xf32> to vector<1x8x128xf32>
      %cst_129 = arith.constant dense<0.000000e+00> : vector<1xf32>
      %282 = vector.multi_reduction <add>, %281, %cst_129 [1, 2] : vector<1x8x128xf32> to vector<1xf32>
      %283 = vector.shape_cast %282 : vector<1xf32> to vector<1x1x1xf32>
      %284 = vector.extract %283[0, 0, 0] : f32 from vector<1x1x1xf32>
      %285 = vector.broadcast %284 : f32 to vector<1x1xf32>
      %286 = vector.broadcast %cst_116 : f32 to vector<1x1xf32>
      %287 = arith.mulf %285, %286 : vector<1x1xf32>
      %cst_130 = arith.constant 0.000000e+00 : f32
      %288 = vector.broadcast %cst_130 : f32 to vector<8x128xf32>
      %c0_i32_131 = arith.constant 0 : i32
      %c1024_i32_132 = arith.constant 1024 : i32
      %289 = arith.muli %c0_i32_131, %c1024_i32_132 : i32
      %290 = vector.broadcast %289 : i32 to vector<8x128xi32>
      %291 = arith.addi %290, %4 : vector<8x128xi32>
      %c12_i32_133 = arith.constant 12 : i32
      %292 = vector.broadcast %c12_i32_133 : i32 to vector<8x128xi32>
      %293 = arith.cmpi slt, %291, %292 : vector<8x128xi32>
      %c6_i32_134 = arith.constant 6 : i32
      %294 = arith.muli %c0_i32_131, %c6_i32_134 : i32
      %c0_i32_135 = arith.constant 0 : i32
      %295 = arith.addi %294, %c0_i32_135 : i32
      %296 = arith.index_cast %295 : i32 to index
      %c0_136 = arith.constant 0 : index
      %c0_137 = arith.constant 0 : index
      %297 = vector.load %arg4[%296, %c0_136, %c0_137] : memref<6x8x128xf32, #tpu.memory_space<vmem>>, vector<1x8x128xf32>
      %298 = vector.shape_cast %297 : vector<1x8x128xf32> to vector<8x128xf32>
      %299 = vector.broadcast %269 : vector<1x1xf32> to vector<8x128xf32>
      %300 = arith.subf %298, %299 : vector<8x128xf32>
      %c1_i32_138 = arith.constant 1 : i32
      %301 = arith.addi %294, %c1_i32_138 : i32
      %302 = arith.index_cast %301 : i32 to index
      %c0_139 = arith.constant 0 : index
      %c0_140 = arith.constant 0 : index
      %303 = vector.load %arg4[%302, %c0_139, %c0_140] : memref<6x8x128xf32, #tpu.memory_space<vmem>>, vector<1x8x128xf32>
      %304 = vector.shape_cast %303 : vector<1x8x128xf32> to vector<8x128xf32>
      %305 = vector.broadcast %278 : vector<1x1xf32> to vector<8x128xf32>
      %306 = arith.subf %304, %305 : vector<8x128xf32>
      %c2_i32_141 = arith.constant 2 : i32
      %307 = arith.addi %294, %c2_i32_141 : i32
      %308 = arith.index_cast %307 : i32 to index
      %c0_142 = arith.constant 0 : index
      %c0_143 = arith.constant 0 : index
      %309 = vector.load %arg4[%308, %c0_142, %c0_143] : memref<6x8x128xf32, #tpu.memory_space<vmem>>, vector<1x8x128xf32>
      %310 = vector.shape_cast %309 : vector<1x8x128xf32> to vector<8x128xf32>
      %311 = vector.broadcast %287 : vector<1x1xf32> to vector<8x128xf32>
      %312 = arith.subf %310, %311 : vector<8x128xf32>
      %313 = arith.mulf %300, %300 : vector<8x128xf32>
      %314 = arith.mulf %306, %306 : vector<8x128xf32>
      %315 = arith.addf %313, %314 : vector<8x128xf32>
      %316 = arith.mulf %312, %312 : vector<8x128xf32>
      %317 = arith.addf %315, %316 : vector<8x128xf32>
      %318 = math.sqrt %317 : vector<8x128xf32>
      %cst_144 = arith.constant 0.000000e+00 : f32
      %319 = vector.broadcast %cst_144 : f32 to vector<8x128xf32>
      %320 = arith.select %293, %318, %319 : vector<8x128xi1>, vector<8x128xf32>
      %321 = arith.addf %288, %320 : vector<8x128xf32>
      %c1_i32_145 = arith.constant 1 : i32
      %322 = vector.shape_cast %321 : vector<8x128xf32> to vector<1x8x128xf32>
      %cst_146 = arith.constant dense<0.000000e+00> : vector<1xf32>
      %323 = vector.multi_reduction <add>, %322, %cst_146 [1, 2] : vector<1x8x128xf32> to vector<1xf32>
      %324 = vector.shape_cast %323 : vector<1xf32> to vector<1x1x1xf32>
      %325 = vector.extract %324[0, 0, 0] : f32 from vector<1x1x1xf32>
      %326 = vector.broadcast %325 : f32 to vector<1x1xf32>
      %327 = vector.broadcast %cst_116 : f32 to vector<1x1xf32>
      %328 = arith.mulf %326, %327 : vector<1x1xf32>
      %329 = tpu.reciprocal %328 : vector<1x1xf32> -> vector<1x1xf32>
      %cst_147 = arith.constant 0.000000e+00 : f32
      %330 = vector.broadcast %cst_147 : f32 to vector<8x128xf32>
      %c0_i32_148 = arith.constant 0 : i32
      %c1024_i32_149 = arith.constant 1024 : i32
      %331 = arith.muli %c0_i32_148, %c1024_i32_149 : i32
      %332 = vector.broadcast %331 : i32 to vector<8x128xi32>
      %333 = arith.addi %332, %4 : vector<8x128xi32>
      %c12_i32_150 = arith.constant 12 : i32
      %334 = vector.broadcast %c12_i32_150 : i32 to vector<8x128xi32>
      %335 = arith.cmpi slt, %333, %334 : vector<8x128xi32>
      %c6_i32_151 = arith.constant 6 : i32
      %336 = arith.muli %c0_i32_148, %c6_i32_151 : i32
      %c0_i32_152 = arith.constant 0 : i32
      %337 = arith.addi %336, %c0_i32_152 : i32
      %338 = arith.index_cast %337 : i32 to index
      %c0_153 = arith.constant 0 : index
      %c0_154 = arith.constant 0 : index
      %339 = vector.load %arg4[%338, %c0_153, %c0_154] : memref<6x8x128xf32, #tpu.memory_space<vmem>>, vector<1x8x128xf32>
      %340 = vector.shape_cast %339 : vector<1x8x128xf32> to vector<8x128xf32>
      %341 = vector.broadcast %269 : vector<1x1xf32> to vector<8x128xf32>
      %342 = arith.subf %340, %341 : vector<8x128xf32>
      %343 = vector.broadcast %329 : vector<1x1xf32> to vector<8x128xf32>
      %344 = arith.mulf %342, %343 : vector<8x128xf32>
      %c3_i32_155 = arith.constant 3 : i32
      %345 = arith.addi %336, %c3_i32_155 : i32
      %346 = arith.index_cast %345 : i32 to index
      %c0_156 = arith.constant 0 : index
      %c0_157 = arith.constant 0 : index
      %347 = vector.load %arg4[%346, %c0_156, %c0_157] : memref<6x8x128xf32, #tpu.memory_space<vmem>>, vector<1x8x128xf32>
      %348 = vector.shape_cast %347 : vector<1x8x128xf32> to vector<8x128xf32>
      %349 = arith.subf %344, %348 : vector<8x128xf32>
      %c1_i32_158 = arith.constant 1 : i32
      %350 = arith.addi %336, %c1_i32_158 : i32
      %351 = arith.index_cast %350 : i32 to index
      %c0_159 = arith.constant 0 : index
      %c0_160 = arith.constant 0 : index
      %352 = vector.load %arg4[%351, %c0_159, %c0_160] : memref<6x8x128xf32, #tpu.memory_space<vmem>>, vector<1x8x128xf32>
      %353 = vector.shape_cast %352 : vector<1x8x128xf32> to vector<8x128xf32>
      %354 = vector.broadcast %278 : vector<1x1xf32> to vector<8x128xf32>
      %355 = arith.subf %353, %354 : vector<8x128xf32>
      %356 = vector.broadcast %329 : vector<1x1xf32> to vector<8x128xf32>
      %357 = arith.mulf %355, %356 : vector<8x128xf32>
      %c4_i32_161 = arith.constant 4 : i32
      %358 = arith.addi %336, %c4_i32_161 : i32
      %359 = arith.index_cast %358 : i32 to index
      %c0_162 = arith.constant 0 : index
      %c0_163 = arith.constant 0 : index
      %360 = vector.load %arg4[%359, %c0_162, %c0_163] : memref<6x8x128xf32, #tpu.memory_space<vmem>>, vector<1x8x128xf32>
      %361 = vector.shape_cast %360 : vector<1x8x128xf32> to vector<8x128xf32>
      %362 = arith.subf %357, %361 : vector<8x128xf32>
      %c2_i32_164 = arith.constant 2 : i32
      %363 = arith.addi %336, %c2_i32_164 : i32
      %364 = arith.index_cast %363 : i32 to index
      %c0_165 = arith.constant 0 : index
      %c0_166 = arith.constant 0 : index
      %365 = vector.load %arg4[%364, %c0_165, %c0_166] : memref<6x8x128xf32, #tpu.memory_space<vmem>>, vector<1x8x128xf32>
      %366 = vector.shape_cast %365 : vector<1x8x128xf32> to vector<8x128xf32>
      %367 = vector.broadcast %287 : vector<1x1xf32> to vector<8x128xf32>
      %368 = arith.subf %366, %367 : vector<8x128xf32>
      %369 = vector.broadcast %329 : vector<1x1xf32> to vector<8x128xf32>
      %370 = arith.mulf %368, %369 : vector<8x128xf32>
      %c5_i32_167 = arith.constant 5 : i32
      %371 = arith.addi %336, %c5_i32_167 : i32
      %372 = arith.index_cast %371 : i32 to index
      %c0_168 = arith.constant 0 : index
      %c0_169 = arith.constant 0 : index
      %373 = vector.load %arg4[%372, %c0_168, %c0_169] : memref<6x8x128xf32, #tpu.memory_space<vmem>>, vector<1x8x128xf32>
      %374 = vector.shape_cast %373 : vector<1x8x128xf32> to vector<8x128xf32>
      %375 = arith.subf %370, %374 : vector<8x128xf32>
      %376 = arith.mulf %349, %349 : vector<8x128xf32>
      %377 = arith.mulf %362, %362 : vector<8x128xf32>
      %378 = arith.addf %376, %377 : vector<8x128xf32>
      %379 = arith.mulf %375, %375 : vector<8x128xf32>
      %380 = arith.addf %378, %379 : vector<8x128xf32>
      %381 = math.sqrt %380 : vector<8x128xf32>
      %cst_170 = arith.constant 0.000000e+00 : f32
      %382 = vector.broadcast %cst_170 : f32 to vector<8x128xf32>
      %383 = arith.select %335, %381, %382 : vector<8x128xi1>, vector<8x128xf32>
      %384 = arith.addf %330, %383 : vector<8x128xf32>
      %c1_i32_171 = arith.constant 1 : i32
      %385 = vector.shape_cast %384 : vector<8x128xf32> to vector<1x8x128xf32>
      %cst_172 = arith.constant dense<0.000000e+00> : vector<1xf32>
      %386 = vector.multi_reduction <add>, %385, %cst_172 [1, 2] : vector<1x8x128xf32> to vector<1xf32>
      %387 = vector.shape_cast %386 : vector<1xf32> to vector<1x1x1xf32>
      %388 = vector.extract %387[0, 0, 0] : f32 from vector<1x1x1xf32>
      %389 = vector.broadcast %388 : f32 to vector<1x1xf32>
      %c0_173 = arith.constant 0 : index
      %c0_174 = arith.constant 0 : index
      %390 = vector.load %arg6[%c0_173, %c0_174] : memref<8x128xf32, #tpu.memory_space<vmem>>, vector<8x128xf32>
      %391 = vector.shape_cast %390 : vector<8x128xf32> to vector<1x8x128xf32>
      %cst_175 = arith.constant dense<0.000000e+00> : vector<1xf32>
      %392 = vector.multi_reduction <add>, %391, %cst_175 [1, 2] : vector<1x8x128xf32> to vector<1xf32>
      %393 = vector.shape_cast %392 : vector<1xf32> to vector<1x1x1xf32>
      %394 = vector.extract %393[0, 0, 0] : f32 from vector<1x1x1xf32>
      %395 = vector.broadcast %394 : f32 to vector<1x1xf32>
      %396 = arith.addf %389, %395 : vector<1x1xf32>
      %397 = vector.broadcast %cst_116 : f32 to vector<1x1xf32>
      %398 = arith.mulf %396, %397 : vector<1x1xf32>
      %c0_176 = arith.constant 0 : index
      %c0_177 = arith.constant 0 : index
      %399 = vector.load %arg3[%c0_176, %c0_177] : memref<1x1xf32, #tpu.memory_space<vmem>>, vector<1x1xf32>
      tpu.vector_store %arg3[%c0_176, %c0_177], %398 {strides = array<i32>} : memref<1x1xf32, #tpu.memory_space<vmem>>, vector<1x1xf32>,
    } else {
    }
    return
  }
  func.func @transform_0(%arg0: i32) -> (i32, i32, i32, i32) {
    %c0_i32 = arith.constant 0 : i32
    %c0_i32_0 = arith.constant 0 : i32
    %c0_i32_1 = arith.constant 0 : i32
    %c0_i32_2 = arith.constant 0 : i32
    return %c0_i32, %arg0, %c0_i32_0, %c0_i32_1 : i32, i32, i32, i32
  }
  func.func @transform_1(%arg0: i32) -> (i32, i32, i32, i32) {
    %c0_i32 = arith.constant 0 : i32
    %c0_i32_0 = arith.constant 0 : i32
    %c0_i32_1 = arith.constant 0 : i32
    %c0_i32_2 = arith.constant 0 : i32
    return %c0_i32, %arg0, %c0_i32_0, %c0_i32_1 : i32, i32, i32, i32
  }
  func.func @transform_2(%arg0: i32) -> (i32, i32) {
    %c0_i32 = arith.constant 0 : i32
    %c0_i32_0 = arith.constant 0 : i32
    %c0_i32_1 = arith.constant 0 : i32
    return %c0_i32, %c0_i32_0 : i32, i32
  }
}

</mosaic_0001>

<llo_original>
// kernel: gt_loss.1
$region0: #{gt_loss.1}
  #allocation0 [shape = 'u32[]', space=smem, size = 0x4, offset = 0x4, fixed_abs, tag = 'smem constant byte address 0x4 - core index']
  #allocation1 [shape = 'u32[144,128]{1,0:T(1,128)}', space=vmem, size = 0x12000, scoped, tag = 'internal scratch']
  #allocation2 [shape = 'f32[6,8,128]{2,1,0:T(8,128)}', space=vmem, size = 0x6000, scoped, tag = 'scratch operand']
  #allocation3 [shape = 'f32[3,8,128]{2,1,0:T(8,128)}', space=vmem, size = 0x3000, scoped, tag = 'scratch operand']
  #allocation4 [shape = 'f32[8,128]{1,0:T(8,128)}', space=vmem, size = 0x1000, scoped, tag = 'scratch operand']
  %s0 = inlined_call_operand.vmem [shape: f32[12,1,8,128], index: 0, kind: input, shape index: {}]
  %s1 = inlined_call_operand.vmem [shape: f32[12,1,8,128], index: 1, kind: input, shape index: {}]
  %s2 = inlined_call_operand.hbm [shape: f32[1,1], index: 2, kind: output, shape index: {}]
  %s3 = sld [smem:[#allocation0]]
  $region26: #{gt_loss.1} parent=0
    _
  %s5 = ssub.s32 1, %s3
  %s6 = scalar_select 0, %s5, %s3
  $region1: #{gt_loss.1} parent=0
    #allocation5 [shape = 'u8[512]{0}', space=vmem, size = 0x400, scoped, tag = 'output window, operand 0, single buffered']
    #allocation6 [shape = 's32[1]{0}', space=sflag, size = 0x4, scoped, tag = 'scoped memory for gt_loss.1']
    %7 = vsyncpa [#allocation6], 0
    // Predicated region
    $region2: #{gt_loss.1} parent=1 // pred_check
      _
    $region3: #{gt_loss.1} parent=1 // pred_check_branch
      %9 = sbr.rel (0) target = $region5
    $region4: #{gt_loss.1} parent=1 // pred_region
      _
    $region5: #{gt_loss.1} parent=1 // pred_fallthru
      _
    // Predicated region
    $region6: #{gt_loss.1} parent=1 // pred_check
      _
    $region7: #{gt_loss.1} parent=1 // pred_check_branch
      %11 = sbr.rel (0) target = $region9
    $region8: #{gt_loss.1} parent=1 // pred_region
      _
    $region9: #{gt_loss.1} parent=1 // pred_fallthru
      _
    %v12 = vlaneseq
    %v13 = vshrl.u32 %v12, 7
    %v14 = vlaneseq
    %v15 = vand.u32 %v14, 127
    %v16 = vmul.u32 %v13, 128
    %v17 = vadd.s32 %v16, %v15
    %p18 = scmp.eq.s32.totalorder 0, 0
    // Predicated region
    $region10: #{gt_loss.1} parent=1 // pred_check
      %p19 = pneg %p18
    $region11: #{gt_loss.1} parent=1 // pred_check_branch
      %21 = sbr.rel (%p19) target = $region13
    $region12: #{gt_loss.1} parent=1 // pred_region
      %22 = vst [vmem:[#allocation3] sm:$0xff] 0.0
      %23 = vst [vmem:[#allocation3 + $0x8] sm:$0xff] 0.0
      %24 = vst [vmem:[#allocation3 + $0x10] sm:$0xff] 0.0
      %25 = vst [vmem:[#allocation4] sm:$0xff] 0.0
    $region13: #{gt_loss.1} parent=1 // pred_fallthru
      _
    %s26 = smul.u32 0, 1024
    %v27 = vstv %s26
    %v28 = vadd.s32 %v27, %v17
    %vm29 = vcmp.lt.s32.totalorder %v28, 12
    %v30 = vld [vmem:[%s0] sm:$0xff]
    %s31 = scalar_lea.vmem %s0, 8
    %v32 = vld [vmem:[%s31] sm:$0xff]
    %s33 = scalar_lea.vmem %s0, 16
    %v34 = vld [vmem:[%s33] sm:$0xff]
    %s35 = scalar_lea.vmem %s0, 24
    %v36 = vld [vmem:[%s35] sm:$0xff]
    %s37 = scalar_lea.vmem %s0, 32
    %v38 = vld [vmem:[%s37] sm:$0xff]
    %s39 = scalar_lea.vmem %s0, 40
    %v40 = vld [vmem:[%s39] sm:$0xff]
    %s41 = scalar_lea.vmem %s0, 48
    %v42 = vld [vmem:[%s41] sm:$0xff]
    %s43 = scalar_lea.vmem %s0, 56
    %v44 = vld [vmem:[%s43] sm:$0xff]
    %s45 = scalar_lea.vmem %s0, 64
    %v46 = vld [vmem:[%s45] sm:$0xff]
    %s47 = scalar_lea.vmem %s0, 72
    %v48 = vld [vmem:[%s47] sm:$0xff]
    %s49 = scalar_lea.vmem %s0, 80
    %v50 = vld [vmem:[%s49] sm:$0xff]
    %s51 = scalar_lea.vmem %s0, 88
    %v52 = vld [vmem:[%s51] sm:$0xff]
    %v53 = vmul.f32 %v30, %v36
    %v54 = vmul.f32 %v38, %v44
    %v55 = vadd.f32 %v53, %v54
    %v56 = vmul.f32 %v46, %v52
    %v57 = vadd.f32 %v55, %v56
    %v58 = vsub.f32 0.0, %v57
    %v59 = vmul.f32 %v32, %v36
    %v60 = vmul.f32 %v40, %v44
    %v61 = vadd.f32 %v59, %v60
    %v62 = vmul.f32 %v48, %v52
    %v63 = vadd.f32 %v61, %v62
    %v64 = vsub.f32 0.0, %v63
    %v65 = vmul.f32 %v34, %v36
    %v66 = vmul.f32 %v42, %v44
    %v67 = vadd.f32 %v65, %v66
    %v68 = vmul.f32 %v50, %v52
    %v69 = vadd.f32 %v67, %v68
    %v70 = vsub.f32 0.0, %v69
    %v71 = vld [vmem:[%s1] sm:$0xff]
    %s72 = scalar_lea.vmem %s1, 8
    %v73 = vld [vmem:[%s72] sm:$0xff]
    %s74 = scalar_lea.vmem %s1, 16
    %v75 = vld [vmem:[%s74] sm:$0xff]
    %s76 = scalar_lea.vmem %s1, 24
    %v77 = vld [vmem:[%s76] sm:$0xff]
    %s78 = scalar_lea.vmem %s1, 32
    %v79 = vld [vmem:[%s78] sm:$0xff]
    %s80 = scalar_lea.vmem %s1, 40
    %v81 = vld [vmem:[%s80] sm:$0xff]
    %s82 = scalar_lea.vmem %s1, 48
    %v83 = vld [vmem:[%s82] sm:$0xff]
    %s84 = scalar_lea.vmem %s1, 56
    %v85 = vld [vmem:[%s84] sm:$0xff]
    %s86 = scalar_lea.vmem %s1, 64
    %v87 = vld [vmem:[%s86] sm:$0xff]
    %s88 = scalar_lea.vmem %s1, 72
    %v89 = vld [vmem:[%s88] sm:$0xff]
    %s90 = scalar_lea.vmem %s1, 80
    %v91 = vld [vmem:[%s90] sm:$0xff]
    %s92 = scalar_lea.vmem %s1, 88
    %v93 = vld [vmem:[%s92] sm:$0xff]
    %v94 = vmul.f32 %v71, %v77
    %v95 = vmul.f32 %v79, %v85
    %v96 = vadd.f32 %v94, %v95
    %v97 = vmul.f32 %v87, %v93
    %v98 = vadd.f32 %v96, %v97
    %v99 = vsub.f32 0.0, %v98
    %v100 = vmul.f32 %v73, %v77
    %v101 = vmul.f32 %v81, %v85
    %v102 = vadd.f32 %v100, %v101
    %v103 = vmul.f32 %v89, %v93
    %v104 = vadd.f32 %v102, %v103
    %v105 = vsub.f32 0.0, %v104
    %v106 = vmul.f32 %v75, %v77
    %v107 = vmul.f32 %v83, %v85
    %v108 = vadd.f32 %v106, %v107
    %v109 = vmul.f32 %v91, %v93
    %v110 = vadd.f32 %v108, %v109
    %v111 = vsub.f32 0.0, %v110
    %s112 = smul.u32 0, 6
    %s113 = smul.u32 %s112, 8
    %s114 = scalar_lea.vmem [#allocation2], %s113
    %115 = vst [vmem:[%s114] sm:$0xff] %v58
    %s116 = sadd.s32 %s112, 1
    %s117 = smul.u32 %s116, 8
    %s118 = scalar_lea.vmem [#allocation2], %s117
    %119 = vst [vmem:[%s118] sm:$0xff] %v64
    %s120 = sadd.s32 %s112, 2
    %s121 = smul.u32 %s120, 8
    %s122 = scalar_lea.vmem [#allocation2], %s121
    %123 = vst [vmem:[%s122] sm:$0xff] %v70
    %s124 = sadd.s32 %s112, 3
    %s125 = smul.u32 %s124, 8
    %s126 = scalar_lea.vmem [#allocation2], %s125
    %127 = vst [vmem:[%s126] sm:$0xff] %v99
    %s128 = sadd.s32 %s112, 4
    %s129 = smul.u32 %s128, 8
    %s130 = scalar_lea.vmem [#allocation2], %s129
    %131 = vst [vmem:[%s130] sm:$0xff] %v105
    %s132 = sadd.s32 %s112, 5
    %s133 = smul.u32 %s132, 8
    %s134 = scalar_lea.vmem [#allocation2], %s133
    %135 = vst [vmem:[%s134] sm:$0xff] %v111
    %v136 = vld [vmem:[#allocation3] sm:$0xff]
    %v137 = vsel %vm29, %v58, 0.0
    %v138 = vadd.f32 %v136, %v137
    %139 = vst [vmem:[#allocation3] sm:$0xff] %v138
    %s140 = scalar_lea.vmem [#allocation3], 8
    %v141 = vld [vmem:[%s140] sm:$0xff]
    %v142 = vsel %vm29, %v64, 0.0
    %v143 = vadd.f32 %v141, %v142
    %144 = vst [vmem:[%s140] sm:$0xff] %v143
    %s145 = scalar_lea.vmem [#allocation3], 16
    %v146 = vld [vmem:[%s145] sm:$0xff]
    %v147 = vsel %vm29, %v70, 0.0
    %v148 = vadd.f32 %v146, %v147
    %149 = vst [vmem:[%s145] sm:$0xff] %v148
    %v150 = vmul.f32 %v30, %v30
    %v151 = vmul.f32 %v32, %v32
    %v152 = vadd.f32 %v150, %v151
    %v153 = vmul.f32 %v34, %v34
    %v154 = vadd.f32 %v152, %v153
    %v155 = vmul.f32 %v38, %v38
    %v156 = vadd.f32 %v154, %v155
    %v157 = vmul.f32 %v40, %v40
    %v158 = vadd.f32 %v156, %v157
    %v159 = vmul.f32 %v42, %v42
    %v160 = vadd.f32 %v158, %v159
    %v161 = vmul.f32 %v46, %v46
    %v162 = vadd.f32 %v160, %v161
    %v163 = vmul.f32 %v48, %v48
    %v164 = vadd.f32 %v162, %v163
    %v165 = vmul.f32 %v50, %v50
    %v166 = vadd.f32 %v164, %v165
    %v167 = vmul.f32 %v71, %v71
    %v168 = vmul.f32 %v73, %v73
    %v169 = vadd.f32 %v167, %v168
    %v170 = vmul.f32 %v75, %v75
    %v171 = vadd.f32 %v169, %v170
    %v172 = vmul.f32 %v79, %v79
    %v173 = vadd.f32 %v171, %v172
    %v174 = vmul.f32 %v81, %v81
    %v175 = vadd.f32 %v173, %v174
    %v176 = vmul.f32 %v83, %v83
    %v177 = vadd.f32 %v175, %v176
    %v178 = vmul.f32 %v87, %v87
    %v179 = vadd.f32 %v177, %v178
    %v180 = vmul.f32 %v89, %v89
    %v181 = vadd.f32 %v179, %v180
    %v182 = vmul.f32 %v91, %v91
    %v183 = vadd.f32 %v181, %v182
    %v184 = vmul.f32 %v30, %v71
    %v185 = vmul.f32 %v32, %v73
    %v186 = vadd.f32 %v184, %v185
    %v187 = vmul.f32 %v34, %v75
    %v188 = vadd.f32 %v186, %v187
    %v189 = vmul.f32 %v38, %v79
    %v190 = vadd.f32 %v188, %v189
    %v191 = vmul.f32 %v40, %v81
    %v192 = vadd.f32 %v190, %v191
    %v193 = vmul.f32 %v42, %v83
    %v194 = vadd.f32 %v192, %v193
    %v195 = vmul.f32 %v46, %v87
    %v196 = vadd.f32 %v194, %v195
    %v197 = vmul.f32 %v48, %v89
    %v198 = vadd.f32 %v196, %v197
    %v199 = vmul.f32 %v50, %v91
    %v200 = vadd.f32 %v198, %v199
    %v201 = vsel %vm29, %v166, 1.0
    %v202 = vsel %vm29, %v183, 1.0
    %v203 = vand.u32 2147483647, %v200
    %v204 = vrsqrt.pop %v201
    %v205 = vrsqrt.pop %v202
    %v206 = vmul.f32 %v204, %v205
    %v207 = vmul.f32 %v203, %v206
    %v208 = vmul.f32 %v207, 2.0
    %v209 = vsub.f32 2.0, %v208
    %v210 = vmax.f32 %v209, 0.0
    %v211 = vrsqrt.pop %v210
    %v212 = vmul.f32 %v210, %v211
    %vm213 = vcmp.eq.f32.partialorder %v210, inf
    %v214 = vsel %vm213, %v210, %v212
    %vm215 = vcmp.eq.f32.partialorder %v210, 0.0
    %v216 = vand.u32 %v210, 2147483648
    %v217 = vsel %vm215, %v216, %v214
    %v218 = vld [vmem:[#allocation4] sm:$0xff]
    %v219 = vsel %vm29, %v217, 0.0
    %v220 = vadd.f32 %v218, %v219
    %221 = vst [vmem:[#allocation4] sm:$0xff] %v220
    // Predicated region
    $region14: #{gt_loss.1} parent=1 // pred_check
      %p222 = pneg %p18
    $region15: #{gt_loss.1} parent=1 // pred_check_branch
      %224 = sbr.rel (%p222) target = $region17
    $region16: #{gt_loss.1} parent=1 // pred_region
      %v225 = vld [vmem:[#allocation3] sm:$0xff]
      %226 = vadd.xlane.f32.xlu0 %v225
      %v227 = vpop.xlane.xlu0 %226
      %v228 = vrot.slane %v227, 4
      %v229 = vadd.f32 %v227, %v228
      %v230 = vrot.slane %v229, 2
      %v231 = vadd.f32 %v229, %v230
      %v232 = vrot.slane %v231, 1
      %v233 = vadd.f32 %v231, %v232
      %s234 = vtos %v233
      %v235 = vstv %s234
      %v236 = vmul.f32 %v235, 0.083333336
      %v237 = vld [vmem:[%s140] sm:$0xff]
      %238 = vadd.xlane.f32.xlu0 %v237
      %v239 = vpop.xlane.xlu0 %238
      %v240 = vrot.slane %v239, 4
      %v241 = vadd.f32 %v239, %v240
      %v242 = vrot.slane %v241, 2
      %v243 = vadd.f32 %v241, %v242
      %v244 = vrot.slane %v243, 1
      %v245 = vadd.f32 %v243, %v244
      %s246 = vtos %v245
      %v247 = vstv %s246
      %v248 = vmul.f32 %v247, 0.083333336
      %v249 = vld [vmem:[%s145] sm:$0xff]
      %250 = vadd.xlane.f32.xlu0 %v249
      %v251 = vpop.xlane.xlu0 %250
      %v252 = vrot.slane %v251, 4
      %v253 = vadd.f32 %v251, %v252
      %v254 = vrot.slane %v253, 2
      %v255 = vadd.f32 %v253, %v254
      %v256 = vrot.slane %v255, 1
      %v257 = vadd.f32 %v255, %v256
      %s258 = vtos %v257
      %v259 = vstv %s258
      %v260 = vmul.f32 %v259, 0.083333336
      %vm261 = vcmp.lt.s32.totalorder %v17, 12
      %v262 = vld [vmem:[#allocation2] sm:$0xff]
      %v263 = vsub.f32 %v262, %v236
      %s264 = scalar_lea.vmem [#allocation2], 8
      %v265 = vld [vmem:[%s264] sm:$0xff]
      %v266 = vsub.f32 %v265, %v248
      %s267 = scalar_lea.vmem [#allocation2], 16
      %v268 = vld [vmem:[%s267] sm:$0xff]
      %v269 = vsub.f32 %v268, %v260
      %v270 = vmul.f32 %v263, %v263
      %v271 = vmul.f32 %v266, %v266
      %v272 = vadd.f32 %v270, %v271
      %v273 = vmul.f32 %v269, %v269
      %v274 = vadd.f32 %v272, %v273
      %v275 = vrsqrt.pop %v274
      %v276 = vmul.f32 %v274, %v275
      %vm277 = vcmp.eq.f32.partialorder %v274, inf
      %v278 = vsel %vm277, %v274, %v276
      %vm279 = vcmp.eq.f32.partialorder %v274, 0.0
      %v280 = vand.u32 %v274, 2147483648
      %v281 = vsel %vm279, %v280, %v278
      %v282 = vsel %vm261, %v281, 0.0
      %v283 = vadd.f32 %v282, 0.0
      %284 = vadd.xlane.f32.xlu0 %v283
      %v285 = vpop.xlane.xlu0 %284
      %v286 = vrot.slane %v285, 4
      %v287 = vadd.f32 %v285, %v286
      %v288 = vrot.slane %v287, 2
      %v289 = vadd.f32 %v287, %v288
      %v290 = vrot.slane %v289, 1
      %v291 = vadd.f32 %v289, %v290
      %s292 = vtos %v291
      %v293 = vstv %s292
      %v294 = vmul.f32 %v293, 0.083333336
      %v295 = vrcp.pop %v294
      %v296 = vmul.f32 %v263, %v295
      %s297 = scalar_lea.vmem [#allocation2], 24
      %v298 = vld [vmem:[%s297] sm:$0xff]
      %v299 = vsub.f32 %v296, %v298
      %v300 = vmul.f32 %v266, %v295
      %s301 = scalar_lea.vmem [#allocation2], 32
      %v302 = vld [vmem:[%s301] sm:$0xff]
      %v303 = vsub.f32 %v300, %v302
      %v304 = vmul.f32 %v269, %v295
      %s305 = scalar_lea.vmem [#allocation2], 40
      %v306 = vld [vmem:[%s305] sm:$0xff]
      %v307 = vsub.f32 %v304, %v306
      %v308 = vmul.f32 %v299, %v299
      %v309 = vmul.f32 %v303, %v303
      %v310 = vadd.f32 %v308, %v309
      %v311 = vmul.f32 %v307, %v307
      %v312 = vadd.f32 %v310, %v311
      %v313 = vrsqrt.pop %v312
      %v314 = vmul.f32 %v312, %v313
      %vm315 = vcmp.eq.f32.partialorder %v312, inf
      %v316 = vsel %vm315, %v312, %v314
      %vm317 = vcmp.eq.f32.partialorder %v312, 0.0
      %v318 = vand.u32 %v312, 2147483648
      %v319 = vsel %vm317, %v318, %v316
      %v320 = vsel %vm261, %v319, 0.0
      %v321 = vadd.f32 %v320, 0.0
      %322 = vadd.xlane.f32.xlu0 %v321
      %v323 = vpop.xlane.xlu0 %322
      %v324 = vrot.slane %v323, 4
      %v325 = vadd.f32 %v323, %v324
      %v326 = vrot.slane %v325, 2
      %v327 = vadd.f32 %v325, %v326
      %v328 = vrot.slane %v327, 1
      %v329 = vadd.f32 %v327, %v328
      %s330 = vtos %v329
      %v331 = vstv %s330
      %v332 = vld [vmem:[#allocation4] sm:$0xff]
      %333 = vadd.xlane.f32.xlu0 %v332
      %v334 = vpop.xlane.xlu0 %333
      %v335 = vrot.slane %v334, 4
      %v336 = vadd.f32 %v334, %v335
      %v337 = vrot.slane %v336, 2
      %v338 = vadd.f32 %v336, %v337
      %v339 = vrot.slane %v338, 1
      %v340 = vadd.f32 %v338, %v339
      %s341 = vtos %v340
      %v342 = vstv %s341
      %v343 = vadd.f32 %v331, %v342
      %v344 = vmul.f32 %v343, 0.083333336
      %vm345 = vcmask 0
      %346 = vst.msk [vmem:[#allocation5] sm:$0x1] %vm345, %v344
    $region17: #{gt_loss.1} parent=1 // pred_fallthru
      _
    // Predicated region
    $region18: #{gt_loss.1} parent=1 // pred_check
      _
    $region19: #{gt_loss.1} parent=1 // pred_check_branch
      %348 = sbr.rel (0) target = $region21
    $region20: #{gt_loss.1} parent=1 // pred_region
      %s350 = ssub.s32 16, 16
      %351 = vsyncadd [#allocation6], %s350
      %s353 = sshll.u32 [#allocation5], 4
      %s354 = int_to_ptr.vmem [resolvable:$true] %s353
      %356 = dma.vmem_to_hbm [thread:$0]  %s354, 16, %s2, [#allocation6]
    $region21: #{gt_loss.1} parent=1 // pred_fallthru
      _
    // Predicated region
    $region22: #{gt_loss.1} parent=1 // pred_check
      _
    $region23: #{gt_loss.1} parent=1 // pred_check_branch
      %358 = sbr.rel (0) target = $region25
    $region24: #{gt_loss.1} parent=1 // pred_region
      %359 = dma.done [#allocation6], 16
    $region25: #{gt_loss.1} parent=1 // pred_fallthru
      _
    %360 = vsyncpa [#allocation6], 1

</llo_original>
